<compile_context>
chip_gen: v7x
topology: tpu7x:2x2x1
jax: 0.10.0
libtpu: 0.0.40
codegen_flags: <defaults>
</compile_context>

<pallas_src>
import numpy as np
import jax
import jax.numpy as jnp
from jax.experimental import pallas as pl
from jax.experimental.pallas import tpu as pltpu

_LANE = 128
_SUBLANE = 8


def _round_up(x: int, m: int) -> int:
    return (x + m - 1) // m * m


def _vmem_capacity_bytes() -> int:
    """Best-effort query of physical VMEM; falls back to the smallest (v7x) size."""
    try:
        info = pltpu.get_tpu_info()
        cap = getattr(info, "vmem_capacity_bytes", None)
        if cap:
            return int(cap)
    except Exception:
        pass
    return 64 * 1024 * 1024


def _adjacency_counts_kernel(lab_ref, out_ref):
    """One (batch, pair-block) grid step.

    lab_ref : (1, 2, TP) int32        row 0 = left labels, row 1 = right labels, -1 = pad
    out_ref : (1, N_sub, N_lane) f32  revisited block = accumulator across the pair axis
    """
    k = pl.program_id(1)

    @pl.when(k == 0)
    def _init():
        out_ref[...] = jnp.zeros_like(out_ref)

    lab = lab_ref[0]                                   # (2, TP) int32
    tp = lab.shape[-1]
    n_sub = out_ref.shape[1]
    n_lane = out_ref.shape[2]

    left = lab[0:1, :]                                 # (1, TP) lane-major

    # Right labels relayouted to sublane-major via a native (8,128)-tile transpose; only the
    # TP-length vector moves, never an (N, TP) matrix.
    right_rows = jnp.broadcast_to(lab[1:2, :], (_SUBLANE, tp))     # (8, TP)
    right_col = right_rows.T[:, 0:1]                               # (TP, 1)

    # LHS one-hot: rows = segment id (sublanes, padded to 8), cols = pair (lanes).
    row_iota = jax.lax.broadcasted_iota(jnp.int32, (n_sub, tp), 0)
    onehot_l = (row_iota == left).astype(jnp.bfloat16)             # (N_sub, TP)

    # RHS one-hot pre-transposed: rows = pair (sublanes), cols = segment id (lanes).
    col_iota = jax.lax.broadcasted_iota(jnp.int32, (tp, n_lane), 1)
    onehot_rt = (col_iota == right_col).astype(jnp.bfloat16)       # (TP, N_lane)

    # C[u, v] += #pairs with left label u and right label v (bf16 MXU, f32 accumulate;
    # padding labels (-1) never match any iota value so they contribute nothing).
    out_ref[0, :, :] += jax.lax.dot_general(
        onehot_l, onehot_rt,
        dimension_numbers=(((1,), (0,)), ((), ())),
        preferred_element_type=jnp.float32)


def spatial_adjacency(segments, n_segments: int, keep_self_loops: bool = False,
                      pair_block: int | None = None):
    """JAX/Pallas equivalent of SpatialAdjacency.forward.

    n_segments must be supplied statically (JAX output shapes are static); in the PyTorch
    module it is amax(segments) + 1.
    """
    if segments.ndim == 4:                  # (B, 1, H, W) -> (B, H, W)
        segments = segments[:, 0]
    segments = segments.astype(jnp.int32)
    b, h, w = segments.shape

    n = int(n_segments)
    n_sub = _round_up(max(n, 1), _SUBLANE)   # output rows  (MXU M dim)
    n_lane = _round_up(max(n, 1), _LANE)     # output cols  (lane-dense stores)

    # Horizontally adjacent pixel pairs (what conv2d with the selector kernel reads).
    left = segments[:, :, :-1].reshape(b, -1)
    right = segments[:, :, 1:].reshape(b, -1)
    p = left.shape[1]

    # --- generation-aware pair-tile (TP) sizing -------------------------------------
    cap = _vmem_capacity_bytes()
    if cap >= 128 * 1024 * 1024:
        # v5e / v6e: 128 MiB physical -> raise the scoped limit, larger temporaries budget.
        vmem_limit = 64 * 1024 * 1024
        budget = 16 * 1024 * 1024
    else:
        # v7x (64 MiB physical) or unknown: stay under the default scoped limit.
        vmem_limit = None
        budget = 8 * 1024 * 1024
    # Per-pair in-kernel temporaries: bf16 one-hots + int32 iotas (~6 B per output row/col)
    # plus the double-buffered int32 label stream (~16 B).  Fixed: the resident output block.
    fixed = 2 * 4 * n_sub * n_lane
    per_pair = 6 * (n_sub + n_lane) + 16
    avail = max(budget - fixed, per_pair * _LANE)
    tp_cap = min(16384, max(_LANE, (avail // per_pair) // _LANE * _LANE))
    if pair_block is not None:
        tp_cap = max(_LANE, _round_up(int(pair_block), _LANE))
    tp = min(_round_up(max(p, 1), _LANE), tp_cap)
    p_pad = _round_up(max(p, 1), tp)
    num_k = p_pad // tp

    # Single packed label stream: row 0 = left, row 1 = right, -1 marks padding.
    pairs = jnp.stack([left, right], axis=1)                                  # (B, 2, P)
    pairs = jnp.pad(pairs, ((0, 0), (0, 0), (0, p_pad - p)), constant_values=-1)

    # TODO(synk): for n_segments >= ~1024 the (n_sub, n_lane) output block alone approaches
    # the VMEM budget; add an output-row tiling axis (recomputing the RHS one-hot per row
    # tile) before targeting that regime.
    counts = pl.pallas_call(
        _adjacency_counts_kernel,
        out_shape=jax.ShapeDtypeStruct((b, n_sub, n_lane), jnp.float32),
        grid_spec=pltpu.PrefetchScalarGridSpec(
            num_scalar_prefetch=0,
            grid=(b, num_k),
            in_specs=[pl.BlockSpec((1, 2, tp), lambda i, k: (i, 0, k))],
            out_specs=pl.BlockSpec((1, n_sub, n_lane), lambda i, k: (i, 0, 0)),
        ),
        compiler_params=pltpu.CompilerParams(
            dimension_semantics=("parallel", "arbitrary"),
            vmem_limit_bytes=vmem_limit),
    )(pairs)

    # Tiny O(B*n^2) epilogue in XLA: symmetrize and handle the diagonal.
    c = counts[:, :n, :n]
    sym = c + jnp.swapaxes(c, 1, 2)
    eye = jnp.eye(n, dtype=bool)
    if keep_self_loops:
        return jnp.where(eye, sym * 0.5, sym)       # diagonal becomes diag(C)
    return jnp.where(eye, jnp.zeros_like(sym), sym)


def _reference(segments, n_segments: int, keep_self_loops: bool = False):
    """Pure numpy reference mirroring the PyTorch module."""
    seg = np.asarray(segments)
    if seg.ndim == 4:
        seg = seg[:, 0]
    b = seg.shape[0]
    n = int(n_segments)
    c = np.zeros((b, n, n), dtype=np.float32)
    for bi in range(b):
        l = seg[bi, :, :-1].reshape(-1)
        r = seg[bi, :, 1:].reshape(-1)
        for u, v in zip(l, r):
            c[bi, u, v] += 1.0
    sym = c + c.transpose(0, 2, 1)
    for bi in range(b):
        if keep_self_loops:
            np.fill_diagonal(sym[bi], np.diagonal(c[bi]))
        else:
            np.fill_diagonal(sym[bi], 0.0)
    return sym


if __name__ == "__main__":
    key = jax.random.PRNGKey(0)
    b, h, w = 2, 16, 16
    num_labels = 6
    segments = jax.random.randint(key, (b, h, w), 0, num_labels, dtype=jnp.int32)

    # TODO(synk): n_segments (= amax(segments)+1 in the PyTorch module) must be static in
    # JAX; pass it from the data pipeline to avoid this host<->device sync.
    n_segments = int(jnp.max(segments)) + 1

    refs = {k: _reference(np.asarray(segments), n_segments, keep_self_loops=k)
            for k in (False, True)}

    for keep in (False, True):
        adj = jax.block_until_ready(
            spatial_adjacency(segments, n_segments, keep_self_loops=keep))
        np.testing.assert_allclose(np.asarray(adj), refs[keep], rtol=0, atol=0)
        assert adj.shape == (b, n_segments, n_segments)
        assert adj.dtype == jnp.float32

    # (B, 1, H, W) input path.
    adj4 = jax.block_until_ready(spatial_adjacency(segments[:, None], n_segments))
    np.testing.assert_allclose(np.asarray(adj4), refs[False], rtol=0, atol=0)

    # Force a multi-step reduction over the pair axis to exercise the revisited-output
    # accumulator pattern.
    adj_tiled = jax.block_until_ready(
        spatial_adjacency(segments, n_segments, keep_self_loops=False, pair_block=128))
    np.testing.assert_allclose(np.asarray(adj_tiled), refs[False], rtol=0, atol=0)

    print("KERNEL_OK")
</pallas_src>

<mosaic_0001>
module attributes {stable_mosaic.version = 11 : i64} {
  func.func @_adjacency_counts_kernel(%arg0: i32, %arg1: i32, %arg2: memref<1x2x256xi32, #tpu.memory_space<vmem>>, %arg3: memref<1x8x128xf32, #tpu.memory_space<vmem>>) attributes {dimension_semantics = [#tpu.dimension_semantics<parallel>, #tpu.dimension_semantics<arbitrary>], iteration_bounds = array<i64: 2, 1>, scalar_prefetch = 0 : i64, scratch_operands = 0 : i64, tpu.core_type = #tpu.core_type<tc>, window_params = [{transform_indices = @transform_0, window_bounds = array<i64: 1, 2, 256>}, {transform_indices = @transform_1, window_bounds = array<i64: 1, 8, 128>}]} {
    %c0_i32 = arith.constant 0 : i32
    %0 = arith.cmpi eq, %arg1, %c0_i32 : i32
    %1 = arith.extui %0 : i1 to i32
    %c0_i32_0 = arith.constant 0 : i32
    %2 = arith.cmpi ne, %1, %c0_i32_0 : i32
    scf.if %2 {
      %cst_9 = arith.constant 0.000000e+00 : f32
      %30 = vector.broadcast %cst_9 : f32 to vector<1x8x128xf32>
      %c0_10 = arith.constant 0 : index
      %c0_11 = arith.constant 0 : index
      %c0_12 = arith.constant 0 : index
      %31 = vector.load %arg3[%c0_10, %c0_11, %c0_12] : memref<1x8x128xf32, #tpu.memory_space<vmem>>, vector<1x8x128xf32>
      tpu.vector_store %arg3[%c0_10, %c0_11, %c0_12], %30 {strides = array<i32>} : memref<1x8x128xf32, #tpu.memory_space<vmem>>, vector<1x8x128xf32>,
    } else {
    }
    %c0 = arith.constant 0 : index
    %c0_1 = arith.constant 0 : index
    %c0_2 = arith.constant 0 : index
    %3 = vector.load %arg2[%c0, %c0_1, %c0_2] : memref<1x2x256xi32, #tpu.memory_space<vmem>>, vector<1x2x256xi32>
    %4 = vector.shape_cast %3 : vector<1x2x256xi32> to vector<2x256xi32>
    %5 = vector.extract_strided_slice %4 {offsets = [0, 0], sizes = [1, 256], strides = [1, 1]} : vector<2x256xi32> to vector<1x256xi32>
    %6 = vector.extract_strided_slice %4 {offsets = [1, 0], sizes = [1, 256], strides = [1, 1]} : vector<2x256xi32> to vector<1x256xi32>
    %7 = vector.shape_cast %6 : vector<1x256xi32> to vector<1x256xi32>
    %8 = vector.broadcast %7 : vector<1x256xi32> to vector<8x256xi32>
    %9 = tpu.transpose %8, [1, 0] : vector<8x256xi32> -> vector<256x8xi32>
    %10 = vector.extract_strided_slice %9 {offsets = [0, 0], sizes = [256, 1], strides = [1, 1]} : vector<256x8xi32> to vector<256x1xi32>
    %11 = tpu.iota {dimensions = array<i32: 0>} : vector<8x256xi32>
    %12 = vector.broadcast %5 : vector<1x256xi32> to vector<8x256xi32>
    %13 = arith.cmpi eq, %11, %12 : vector<8x256xi32>
    %14 = arith.extui %13 : vector<8x256xi1> to vector<8x256xi32>
    %15 = arith.sitofp %14 : vector<8x256xi32> to vector<8x256xf32>
    %16 = arith.truncf %15 : vector<8x256xf32> to vector<8x256xbf16>
    %17 = tpu.iota {dimensions = array<i32: 1>} : vector<256x128xi32>
    %18 = vector.broadcast %10 : vector<256x1xi32> to vector<256x128xi32>
    %19 = arith.cmpi eq, %17, %18 : vector<256x128xi32>
    %20 = arith.extui %19 : vector<256x128xi1> to vector<256x128xi32>
    %21 = arith.sitofp %20 : vector<256x128xi32> to vector<256x128xf32>
    %22 = arith.truncf %21 : vector<256x128xf32> to vector<256x128xbf16>
    %c0_3 = arith.constant 0 : index
    %c0_4 = arith.constant 0 : index
    %c0_5 = arith.constant 0 : index
    %23 = vector.load %arg3[%c0_3, %c0_4, %c0_5] : memref<1x8x128xf32, #tpu.memory_space<vmem>>, vector<1x8x128xf32>
    %24 = vector.shape_cast %23 : vector<1x8x128xf32> to vector<8x128xf32>
    %cst = arith.constant dense<0.000000e+00> : vector<8x128xf32>
    %25 = tpu.matmul %16, %22, %cst {dimension_numbers = #tpu.dot_dimension_numbers<[1], [0], [0], [1], [0, 0, 1, 1], [], []>} : vector<8x256xbf16>, vector<256x128xbf16>, vector<8x128xf32> -> vector<8x128xf32>
    %26 = arith.addf %24, %25 : vector<8x128xf32>
    %c0_6 = arith.constant 0 : index
    %c0_7 = arith.constant 0 : index
    %c0_8 = arith.constant 0 : index
    %27 = vector.load %arg3[%c0_6, %c0_7, %c0_8] : memref<1x8x128xf32, #tpu.memory_space<vmem>>, vector<1x8x128xf32>
    %28 = vector.shape_cast %27 : vector<1x8x128xf32> to vector<8x128xf32>
    %29 = vector.shape_cast %26 : vector<8x128xf32> to vector<1x8x128xf32>
    tpu.vector_store %arg3[%c0_6, %c0_7, %c0_8], %29 {strides = array<i32>} : memref<1x8x128xf32, #tpu.memory_space<vmem>>, vector<1x8x128xf32>,
    return
  }
  func.func @transform_0(%arg0: i32, %arg1: i32) -> (i32, i32, i32) {
    %c0_i32 = arith.constant 0 : i32
    %c0_i32_0 = arith.constant 0 : i32
    return %arg0, %c0_i32, %arg1 : i32, i32, i32
  }
  func.func @transform_1(%arg0: i32, %arg1: i32) -> (i32, i32, i32) {
    %c0_i32 = arith.constant 0 : i32
    %c0_i32_0 = arith.constant 0 : i32
    %c0_i32_1 = arith.constant 0 : i32
    return %arg0, %c0_i32, %c0_i32_0 : i32, i32, i32
  }
}

</mosaic_0001>

<llo_original>
// kernel: tpu_custom_call.1
$region0: #{tpu_custom_call.1}
  #allocation0 [shape = 'u32[]', space=smem, size = 0x4, offset = 0x4, fixed_abs, tag = 'smem constant byte address 0x4 - core index']
  #allocation1 [shape = 'u32[144,128]{1,0:T(1,128)}', space=vmem, size = 0x12000, scoped, tag = 'internal scratch']
  %s0 = inlined_call_operand.hbm [shape: s32[2,2,256], index: 0, kind: input, shape index: {}]
  %s1 = inlined_call_operand.hbm [shape: f32[2,8,128], index: 1, kind: output, shape index: {}]
  %s2 = sld [smem:[#allocation0]]
  $region45: #{tpu_custom_call.1} parent=0
    _
  %s4 = ssub.s32 1, %s2
  %s5 = scalar_select 0, %s4, %s2
  $region1: #{tpu_custom_call.1} parent=0
    #allocation2 [shape = 'u8[4096]{0}', space=vmem, size = 0x1000, scoped, tag = 'input window, operand 0']
    #allocation3 [shape = 's32[2]{0}', space=sflag, size = 0x8, scoped, tag = 'scoped memory for tpu_custom_call.1']
    #allocation4 [shape = 's32[2]{0}', space=sflag, size = 0x8, scoped, tag = 'scoped memory for tpu_custom_call.1']
    #allocation5 [shape = 'u8[8192]{0}', space=vmem, size = 0x2000, scoped, tag = 'output window, operand 0']
    %6 = vsyncpa [#allocation3], 0
    %s7 = scalar_lea.sflag [#allocation3], 1
    %8 = vsyncpa %s7, 0
    %9 = vsyncpa [#allocation4], 0
    %s10 = scalar_lea.sflag [#allocation4], 1
    %11 = vsyncpa %s10, 0
    loop: start=0, step=1, limit=4
    $region2: #{tpu_custom_call.1} parent=1 // loop_pre_header
      _
    $region3: #{tpu_custom_call.1} parent=1 // loop_header
      %s13 = sphi 0, %s17
      %p14 = scmp.ge.s32.totalorder %s13, 4
      %s20 = sphi 0, %s32
      %s21 = sphi 0, %s28
      %s22 = sphi 0, %s20
      %s23 = sphi 0, %s21
      %s24 = sphi 0, %s22
      %s25 = sphi 0, %s23
      %s37 = sphi 0, %s39
      %s40 = sphi 0, %s37
      %s41 = sphi 0, %s40
      %s57 = sphi 0, %s41
      %s63 = sphi 0, %s65
      %s66 = sphi 0, %s63
      %s67 = sphi 0, %s66
      %s83 = sphi 0, %s67
    $region4: #{tpu_custom_call.1} parent=1 // loop_header_branch
      %16 = sbr.rel (%p14) target = $region8
    $region5: #{tpu_custom_call.1} parent=1 // loop_body
      %s18 = ssub.s32 %s13, 1
      %s19 = ssub.s32 %s13, 2
      %s26 = sadd.s32 1, %s21
      %p27 = scmp.ge.s32.totalorder %s26, 1
      %s28 = scalar_select %p27, 0, %s26
      %s29 = sadd.s32 1, %s20
      %s30 = scalar_select %p27, %s29, %s20
      %p31 = scmp.ge.s32.totalorder %s30, 2
      %s32 = scalar_select %p31, 0, %s30
      %s33 = ssub.s32 %s20, %s32
      %s34 = ssub.s32 %s21, %s28
      %s35 = sor.u32 %s33, %s34
      %p36 = scmp.eq.s32.totalorder %s35, 0
      %s38 = sadd.s32 %s37, 1
      %s39 = scalar_select %p36, %s37, %s38
      %p42 = pneg %p36
      %p43 = scmp.eq.s32.totalorder %s13, 1
      %p44 = por %p42, %p43
      %p45 = scmp.ne.s32.totalorder %s37, %s40
      %p46 = scmp.eq.s32.totalorder %s13, 0
      %p47 = por %p45, %p46
      %p48 = scmp.ne.s32.totalorder %s37, %s40
      %p49 = scmp.eq.s32.totalorder %s18, 1
      %p50 = por %p48, %p49
      %p51 = scmp.ne.s32.totalorder %s40, %s41
      %p52 = scmp.eq.s32.totalorder %s18, 0
      %p53 = por %p51, %p52
      %p54 = scmp.ne.s32.totalorder %s40, %s41
      %p55 = scmp.eq.s32.totalorder %s19, 1
      %p56 = por %p54, %p55
      %p58 = scmp.ne.s32.totalorder %s41, %s57
      %p59 = scmp.eq.s32.totalorder %s19, 0
      %p60 = por %p58, %p59
      %s61 = ssub.s32 %s20, %s32
      %p62 = scmp.eq.s32.totalorder %s61, 0
      %s64 = sadd.s32 %s63, 1
      %s65 = scalar_select %p62, %s63, %s64
      %p68 = pneg %p62
      %p69 = scmp.eq.s32.totalorder %s13, 1
      %p70 = por %p68, %p69
      %p71 = scmp.ne.s32.totalorder %s63, %s66
      %p72 = scmp.eq.s32.totalorder %s13, 0
      %p73 = por %p71, %p72
      %p74 = scmp.ne.s32.totalorder %s63, %s66
      %p75 = scmp.eq.s32.totalorder %s18, 1
      %p76 = por %p74, %p75
      %p77 = scmp.ne.s32.totalorder %s66, %s67
      %p78 = scmp.eq.s32.totalorder %s18, 0
      %p79 = por %p77, %p78
      %p80 = scmp.ne.s32.totalorder %s66, %s67
      %p81 = scmp.eq.s32.totalorder %s19, 1
      %p82 = por %p80, %p81
      %p84 = scmp.ne.s32.totalorder %s67, %s83
      %p85 = scmp.eq.s32.totalorder %s19, 0
      %p86 = por %p84, %p85
      %p87 = scmp.le.s32.totalorder 1, %s13
      %p88 = scmp.lt.s32.totalorder %s13, 3
      %p89 = pnand %p87, %p88
      %p90 = pneg %p89
      // Predicated region
      $region9: #{tpu_custom_call.1} parent=5 // pred_check
        _
      $region10: #{tpu_custom_call.1} parent=5 // pred_check_branch
        %92 = sbr.rel (%p89) target = $region12
      $region11: #{tpu_custom_call.1} parent=5 // pred_region
        %s93 = ssub.s32 %s13, 1
      $region12: #{tpu_custom_call.1} parent=5 // pred_fallthru
        _
      %p94 = scmp.lt.s32.totalorder %s13, 2
      // Predicated region
      $region13: #{tpu_custom_call.1} parent=5 // pred_check
        %p95 = pneg %p94
      $region14: #{tpu_custom_call.1} parent=5 // pred_check_branch
        %97 = sbr.rel (%p95) target = $region16
      $region15: #{tpu_custom_call.1} parent=5 // pred_region
        // Predicated region
        $region17: #{tpu_custom_call.1} parent=15 // pred_check
          %p98 = pneg %p47
        $region18: #{tpu_custom_call.1} parent=15 // pred_check_branch
          %100 = sbr.rel (%p98) target = $region20
        $region19: #{tpu_custom_call.1} parent=15 // pred_region
          %s101 = sand.u32 %s37, 1
          %s102 = scalar_lea.sflag [#allocation3], %s101
          %s103 = sand.u32 %s37, 1
          %s104 = smul.addr %s103, 4
          %s105 = scalar_lea.vmem [#allocation2], %s104
          %s106 = smul.u32 2, %s21
          %s108 = ssub.s32 64, 64
          %109 = vsyncadd %s102, %s108
          %s110 = smul.addr %s20, 2
          %s111 = sadd.s32 %s106, %s110
          %s112 = smul.addr %s111, 32
          %s113 = scalar_lea.hbm %s0, %s112
          %s115 = sshll.u32 %s105, 4
          %s116 = int_to_ptr.vmem [resolvable:$true] %s115
          %118 = dma.hbm_to_vmem [thread:$0]  %s113, 64, %s116, %s102
        $region20: #{tpu_custom_call.1} parent=15 // pred_fallthru
          _
      $region16: #{tpu_custom_call.1} parent=5 // pred_fallthru
        _
      %p119 = scmp.le.s32.totalorder 1, %s13
      %p120 = scmp.lt.s32.totalorder %s13, 3
      %p121 = pnand %p119, %p120
      %p122 = pneg %p121
      // Predicated region
      $region21: #{tpu_custom_call.1} parent=5 // pred_check
        _
      $region22: #{tpu_custom_call.1} parent=5 // pred_check_branch
        %124 = sbr.rel (%p121) target = $region24
      $region23: #{tpu_custom_call.1} parent=5 // pred_region
        %s125 = ssub.s32 %s13, 1
        %s126 = sand.u32 %s40, 1
        %s127 = scalar_lea.sflag [#allocation3], %s126
        %s128 = sand.u32 %s40, 1
        %s129 = smul.addr %s128, 4
        %s130 = scalar_lea.vmem [#allocation2], %s129
        // Predicated region
        $region25: #{tpu_custom_call.1} parent=23 // pred_check
          %p131 = pneg %p53
        $region26: #{tpu_custom_call.1} parent=23 // pred_check_branch
          %133 = sbr.rel (%p131) target = $region28
        $region27: #{tpu_custom_call.1} parent=23 // pred_region
          %134 = dma.done %s127, 64
        $region28: #{tpu_custom_call.1} parent=23 // pred_fallthru
          _
        %s135 = sand.u32 %s40, 1
        %s136 = scalar_lea.sflag [#allocation3], %s135
        %s137 = sand.u32 %s40, 1
        %s138 = smul.addr %s137, 4
        %s139 = scalar_lea.vmem [#allocation2], %s138
        %p140 = pneg %p53
        %p141 = pneg %p50
        %p142 = pneg %p79
        %p143 = pneg %p76
        %s144 = sand.u32 %s66, 1
        %s145 = scalar_lea.sflag [#allocation4], %s144
        %s146 = sand.u32 %s66, 1
        %s147 = smul.addr %s146, 8
        %s148 = scalar_lea.vmem [#allocation5], %s147
        %s149 = smul.u32 2, %s23
        %p151 = scmp.eq.s32.totalorder %s23, 0
        // Predicated region
        $region29: #{tpu_custom_call.1} parent=23 // pred_check
          %p152 = pneg %p151
        $region30: #{tpu_custom_call.1} parent=23 // pred_check_branch
          %154 = sbr.rel (%p152) target = $region32
        $region31: #{tpu_custom_call.1} parent=23 // pred_region
          %155 = vst [vmem:[%s148] sm:$0xff] 0.0
        $region32: #{tpu_custom_call.1} parent=23 // pred_fallthru
          _
        %v156 = vld [vmem:[%s130] sm:$0xf]
        %v157 = vlaneseq
        %v158 = vshrl.u32 %v157, 7
        %v159 = vsub.s32 1, %v158
        %v160 = vrot.slane %v156, %v159
        %v161 = vlaneseq
        %v162 = vshrl.u32 %v161, 7
        %v163 = vsub.s32 3, %v162
        %v164 = vrot.slane %v156, %v163
        %v165 = vlaneseq
        %v166 = vshrl.u32 %v165, 7
        %v167 = vsub.s32 1, %v166
        %v168 = vrot.slane %v160, %v167
        %v169 = vlaneseq
        %v170 = vshrl.u32 %v169, 7
        %v171 = vsub.s32 1, %v170
        %v172 = vrot.slane %v164, %v171
        %173 = vxpose.xlu0.b32.start [1/16] %v168, 128
        %174 = vxpose.xlu0.b32.cont [2/16] 0, 128
        %175 = vxpose.xlu0.b32.cont [3/16] 0, 128
        %176 = vxpose.xlu0.b32.cont [4/16] 0, 128
        %177 = vxpose.xlu0.b32.cont [5/16] 0, 128
        %178 = vxpose.xlu0.b32.cont [6/16] 0, 128
        %179 = vxpose.xlu0.b32.cont [7/16] 0, 128
        %180 = vxpose.xlu0.b32.cont [8/16] 0, 128
        %181 = vxpose.xlu0.b32.cont [9/16] 0, 128
        %182 = vxpose.xlu0.b32.cont [10/16] 0, 128
        %183 = vxpose.xlu0.b32.cont [11/16] 0, 128
        %184 = vxpose.xlu0.b32.cont [12/16] 0, 128
        %185 = vxpose.xlu0.b32.cont [13/16] 0, 128
        %186 = vxpose.xlu0.b32.cont [14/16] 0, 128
        %187 = vxpose.xlu0.b32.cont [15/16] 0, 128
        %188 = vxpose.xlu0.b32.end [16/16] 0, 128
        %v189 = vpop.trf.xlu0
        %v190 = vpop.trf.xlu0
        %v191 = vpop.trf.xlu0
        %v192 = vpop.trf.xlu0
        %v193 = vpop.trf.xlu0
        %v194 = vpop.trf.xlu0
        %v195 = vpop.trf.xlu0
        %v196 = vpop.trf.xlu0
        %v197 = vpop.trf.xlu0
        %v198 = vpop.trf.xlu0
        %v199 = vpop.trf.xlu0
        %v200 = vpop.trf.xlu0
        %v201 = vpop.trf.xlu0
        %v202 = vpop.trf.xlu0
        %v203 = vpop.trf.xlu0
        %v204 = vpop.trf.xlu0
        %205 = vxpose.xlu0.b32.start [1/16] %v172, 128
        %206 = vxpose.xlu0.b32.cont [2/16] 0, 128
        %207 = vxpose.xlu0.b32.cont [3/16] 0, 128
        %208 = vxpose.xlu0.b32.cont [4/16] 0, 128
        %209 = vxpose.xlu0.b32.cont [5/16] 0, 128
        %210 = vxpose.xlu0.b32.cont [6/16] 0, 128
        %211 = vxpose.xlu0.b32.cont [7/16] 0, 128
        %212 = vxpose.xlu0.b32.cont [8/16] 0, 128
        %213 = vxpose.xlu0.b32.cont [9/16] 0, 128
        %214 = vxpose.xlu0.b32.cont [10/16] 0, 128
        %215 = vxpose.xlu0.b32.cont [11/16] 0, 128
        %216 = vxpose.xlu0.b32.cont [12/16] 0, 128
        %217 = vxpose.xlu0.b32.cont [13/16] 0, 128
        %218 = vxpose.xlu0.b32.cont [14/16] 0, 128
        %219 = vxpose.xlu0.b32.cont [15/16] 0, 128
        %220 = vxpose.xlu0.b32.end [16/16] 0, 128
        %v221 = vpop.trf.xlu0
        %v222 = vpop.trf.xlu0
        %v223 = vpop.trf.xlu0
        %v224 = vpop.trf.xlu0
        %v225 = vpop.trf.xlu0
        %v226 = vpop.trf.xlu0
        %v227 = vpop.trf.xlu0
        %v228 = vpop.trf.xlu0
        %v229 = vpop.trf.xlu0
        %v230 = vpop.trf.xlu0
        %v231 = vpop.trf.xlu0
        %v232 = vpop.trf.xlu0
        %v233 = vpop.trf.xlu0
        %v234 = vpop.trf.xlu0
        %v235 = vpop.trf.xlu0
        %v236 = vpop.trf.xlu0
        %v237 = vlaneseq
        %v238 = vshrl.u32 %v237, 7
        %v239 = vlaneseq
        %v240 = vshrl.u32 %v239, 7
        %v241 = vsub.s32 0, %v240
        %v242 = vrot.slane %v156, %v241
        %v243 = vlaneseq
        %v244 = vshrl.u32 %v243, 7
        %v245 = vsub.s32 2, %v244
        %v246 = vrot.slane %v156, %v245
        %v247 = vlaneseq
        %v248 = vshrl.u32 %v247, 7
        %v249 = vsub.s32 0, %v248
        %v250 = vrot.slane %v242, %v249
        %v251 = vlaneseq
        %v252 = vshrl.u32 %v251, 7
        %v253 = vsub.s32 0, %v252
        %v254 = vrot.slane %v246, %v253
        %vm255 = vcmp.eq.s32.totalorder %v238, %v250
        %vm256 = vcmp.eq.s32.totalorder %v238, %v254
        %v257 = vsel %vm255, 1, 0
        %v258 = vsel %vm256, 1, 0
        %v259 = vcvt.s32.f32 %v257
        %v260 = vcvt.s32.f32 %v258
        %v261 = vpack.c.bf16 %v259, %v259
        %v262 = vpack.c.bf16 %v260, %v260
        %v263 = vlaneseq
        %v264 = vand.u32 %v263, 127
        %265 = vset.pattern.permute.xlu0 0
        %266 = vperm.xlu0 %265, %v189
        %v267 = vpop.permute.xlu0 %266
        %268 = vset.pattern.permute.xlu0 0
        %269 = vperm.xlu0 %268, %v190
        %v270 = vpop.permute.xlu0 %269
        %271 = vset.pattern.permute.xlu0 0
        %272 = vperm.xlu0 %271, %v191
        %v273 = vpop.permute.xlu0 %272
        %274 = vset.pattern.permute.xlu0 0
        %275 = vperm.xlu0 %274, %v192
        %v276 = vpop.permute.xlu0 %275
        %277 = vset.pattern.permute.xlu0 0
        %278 = vperm.xlu0 %277, %v193
        %v279 = vpop.permute.xlu0 %278
        %280 = vset.pattern.permute.xlu0 0
        %281 = vperm.xlu0 %280, %v194
        %v282 = vpop.permute.xlu0 %281
        %283 = vset.pattern.permute.xlu0 0
        %284 = vperm.xlu0 %283, %v195
        %v285 = vpop.permute.xlu0 %284
        %286 = vset.pattern.permute.xlu0 0
        %287 = vperm.xlu0 %286, %v196
        %v288 = vpop.permute.xlu0 %287
        %289 = vset.pattern.permute.xlu0 0
        %290 = vperm.xlu0 %289, %v197
        %v291 = vpop.permute.xlu0 %290
        %292 = vset.pattern.permute.xlu0 0
        %293 = vperm.xlu0 %292, %v198
        %v294 = vpop.permute.xlu0 %293
        %295 = vset.pattern.permute.xlu0 0
        %296 = vperm.xlu0 %295, %v199
        %v297 = vpop.permute.xlu0 %296
        %298 = vset.pattern.permute.xlu0 0
        %299 = vperm.xlu0 %298, %v200
        %v300 = vpop.permute.xlu0 %299
        %301 = vset.pattern.permute.xlu0 0
        %302 = vperm.xlu0 %301, %v201
        %v303 = vpop.permute.xlu0 %302
        %304 = vset.pattern.permute.xlu0 0
        %305 = vperm.xlu0 %304, %v202
        %v306 = vpop.permute.xlu0 %305
        %307 = vset.pattern.permute.xlu0 0
        %308 = vperm.xlu0 %307, %v203
        %v309 = vpop.permute.xlu0 %308
        %310 = vset.pattern.permute.xlu0 0
        %311 = vperm.xlu0 %310, %v204
        %v312 = vpop.permute.xlu0 %311
        %313 = vset.pattern.permute.xlu0 0
        %314 = vperm.xlu0 %313, %v221
        %v315 = vpop.permute.xlu0 %314
        %316 = vset.pattern.permute.xlu0 0
        %317 = vperm.xlu0 %316, %v222
        %v318 = vpop.permute.xlu0 %317
        %319 = vset.pattern.permute.xlu0 0
        %320 = vperm.xlu0 %319, %v223
        %v321 = vpop.permute.xlu0 %320
        %322 = vset.pattern.permute.xlu0 0
        %323 = vperm.xlu0 %322, %v224
        %v324 = vpop.permute.xlu0 %323
        %325 = vset.pattern.permute.xlu0 0
        %326 = vperm.xlu0 %325, %v225
        %v327 = vpop.permute.xlu0 %326
        %328 = vset.pattern.permute.xlu0 0
        %329 = vperm.xlu0 %328, %v226
        %v330 = vpop.permute.xlu0 %329
        %331 = vset.pattern.permute.xlu0 0
        %332 = vperm.xlu0 %331, %v227
        %v333 = vpop.permute.xlu0 %332
        %334 = vset.pattern.permute.xlu0 0
        %335 = vperm.xlu0 %334, %v228
        %v336 = vpop.permute.xlu0 %335
        %337 = vset.pattern.permute.xlu0 0
        %338 = vperm.xlu0 %337, %v229
        %v339 = vpop.permute.xlu0 %338
        %340 = vset.pattern.permute.xlu0 0
        %341 = vperm.xlu0 %340, %v230
        %v342 = vpop.permute.xlu0 %341
        %343 = vset.pattern.permute.xlu0 0
        %344 = vperm.xlu0 %343, %v231
        %v345 = vpop.permute.xlu0 %344
        %346 = vset.pattern.permute.xlu0 0
        %347 = vperm.xlu0 %346, %v232
        %v348 = vpop.permute.xlu0 %347
        %349 = vset.pattern.permute.xlu0 0
        %350 = vperm.xlu0 %349, %v233
        %v351 = vpop.permute.xlu0 %350
        %352 = vset.pattern.permute.xlu0 0
        %353 = vperm.xlu0 %352, %v234
        %v354 = vpop.permute.xlu0 %353
        %355 = vset.pattern.permute.xlu0 0
        %356 = vperm.xlu0 %355, %v235
        %v357 = vpop.permute.xlu0 %356
        %358 = vset.pattern.permute.xlu0 0
        %359 = vperm.xlu0 %358, %v236
        %v360 = vpop.permute.xlu0 %359
        %vm361 = vcmp.eq.s32.totalorder %v264, %v267
        %vm362 = vcmp.eq.s32.totalorder %v264, %v270
        %vm363 = vcmp.eq.s32.totalorder %v264, %v273
        %vm364 = vcmp.eq.s32.totalorder %v264, %v276
        %vm365 = vcmp.eq.s32.totalorder %v264, %v279
        %vm366 = vcmp.eq.s32.totalorder %v264, %v282
        %vm367 = vcmp.eq.s32.totalorder %v264, %v285
        %vm368 = vcmp.eq.s32.totalorder %v264, %v288
        %vm369 = vcmp.eq.s32.totalorder %v264, %v291
        %vm370 = vcmp.eq.s32.totalorder %v264, %v294
        %vm371 = vcmp.eq.s32.totalorder %v264, %v297
        %vm372 = vcmp.eq.s32.totalorder %v264, %v300
        %vm373 = vcmp.eq.s32.totalorder %v264, %v303
        %vm374 = vcmp.eq.s32.totalorder %v264, %v306
        %vm375 = vcmp.eq.s32.totalorder %v264, %v309
        %vm376 = vcmp.eq.s32.totalorder %v264, %v312
        %vm377 = vcmp.eq.s32.totalorder %v264, %v315
        %vm378 = vcmp.eq.s32.totalorder %v264, %v318
        %vm379 = vcmp.eq.s32.totalorder %v264, %v321
        %vm380 = vcmp.eq.s32.totalorder %v264, %v324
        %vm381 = vcmp.eq.s32.totalorder %v264, %v327
        %vm382 = vcmp.eq.s32.totalorder %v264, %v330
        %vm383 = vcmp.eq.s32.totalorder %v264, %v333
        %vm384 = vcmp.eq.s32.totalorder %v264, %v336
        %vm385 = vcmp.eq.s32.totalorder %v264, %v339
        %vm386 = vcmp.eq.s32.totalorder %v264, %v342
        %vm387 = vcmp.eq.s32.totalorder %v264, %v345
        %vm388 = vcmp.eq.s32.totalorder %v264, %v348
        %vm389 = vcmp.eq.s32.totalorder %v264, %v351
        %vm390 = vcmp.eq.s32.totalorder %v264, %v354
        %vm391 = vcmp.eq.s32.totalorder %v264, %v357
        %vm392 = vcmp.eq.s32.totalorder %v264, %v360
        %v393 = vsel %vm361, 1, 0
        %v394 = vsel %vm362, 1, 0
        %v395 = vsel %vm363, 1, 0
        %v396 = vsel %vm364, 1, 0
        %v397 = vsel %vm365, 1, 0
        %v398 = vsel %vm366, 1, 0
        %v399 = vsel %vm367, 1, 0
        %v400 = vsel %vm368, 1, 0
        %v401 = vsel %vm369, 1, 0
        %v402 = vsel %vm370, 1, 0
        %v403 = vsel %vm371, 1, 0
        %v404 = vsel %vm372, 1, 0
        %v405 = vsel %vm373, 1, 0
        %v406 = vsel %vm374, 1, 0
        %v407 = vsel %vm375, 1, 0
        %v408 = vsel %vm376, 1, 0
        %v409 = vsel %vm377, 1, 0
        %v410 = vsel %vm378, 1, 0
        %v411 = vsel %vm379, 1, 0
        %v412 = vsel %vm380, 1, 0
        %v413 = vsel %vm381, 1, 0
        %v414 = vsel %vm382, 1, 0
        %v415 = vsel %vm383, 1, 0
        %v416 = vsel %vm384, 1, 0
        %v417 = vsel %vm385, 1, 0
        %v418 = vsel %vm386, 1, 0
        %v419 = vsel %vm387, 1, 0
        %v420 = vsel %vm388, 1, 0
        %v421 = vsel %vm389, 1, 0
        %v422 = vsel %vm390, 1, 0
        %v423 = vsel %vm391, 1, 0
        %v424 = vsel %vm392, 1, 0
        %v425 = vcvt.s32.f32 %v393
        %v426 = vcvt.s32.f32 %v394
        %v427 = vcvt.s32.f32 %v395
        %v428 = vcvt.s32.f32 %v396
        %v429 = vcvt.s32.f32 %v397
        %v430 = vcvt.s32.f32 %v398
        %v431 = vcvt.s32.f32 %v399
        %v432 = vcvt.s32.f32 %v400
        %v433 = vcvt.s32.f32 %v401
        %v434 = vcvt.s32.f32 %v402
        %v435 = vcvt.s32.f32 %v403
        %v436 = vcvt.s32.f32 %v404
        %v437 = vcvt.s32.f32 %v405
        %v438 = vcvt.s32.f32 %v406
        %v439 = vcvt.s32.f32 %v407
        %v440 = vcvt.s32.f32 %v408
        %v441 = vcvt.s32.f32 %v409
        %v442 = vcvt.s32.f32 %v410
        %v443 = vcvt.s32.f32 %v411
        %v444 = vcvt.s32.f32 %v412
        %v445 = vcvt.s32.f32 %v413
        %v446 = vcvt.s32.f32 %v414
        %v447 = vcvt.s32.f32 %v415
        %v448 = vcvt.s32.f32 %v416
        %v449 = vcvt.s32.f32 %v417
        %v450 = vcvt.s32.f32 %v418
        %v451 = vcvt.s32.f32 %v419
        %v452 = vcvt.s32.f32 %v420
        %v453 = vcvt.s32.f32 %v421
        %v454 = vcvt.s32.f32 %v422
        %v455 = vcvt.s32.f32 %v423
        %v456 = vcvt.s32.f32 %v424
        %v457 = vpack.c.bf16 %v426, %v425
        %v458 = vpack.c.bf16 %v428, %v427
        %v459 = vpack.c.bf16 %v430, %v429
        %v460 = vpack.c.bf16 %v432, %v431
        %v461 = vpack.c.bf16 %v434, %v433
        %v462 = vpack.c.bf16 %v436, %v435
        %v463 = vpack.c.bf16 %v438, %v437
        %v464 = vpack.c.bf16 %v440, %v439
        %v465 = vpack.c.bf16 %v442, %v441
        %v466 = vpack.c.bf16 %v444, %v443
        %v467 = vpack.c.bf16 %v446, %v445
        %v468 = vpack.c.bf16 %v448, %v447
        %v469 = vpack.c.bf16 %v450, %v449
        %v470 = vpack.c.bf16 %v452, %v451
        %v471 = vpack.c.bf16 %v454, %v453
        %v472 = vpack.c.bf16 %v456, %v455
        %v473 = vld [vmem:[%s148] sm:$0xff]
        %474 = vmatprep.subr.bf16.mxu0 0
        %475 = vmatpush1.bf16.msra.mxu0 %v457
        %476 = vmatprep.subr.bf16.mxu0 0
        %477 = vmatpush1.bf16.msra.mxu0 %v458
        %478 = vmatprep.subr.bf16.mxu0 0
        %479 = vmatpush1.bf16.msra.mxu0 %v459
        %480 = vmatprep.subr.bf16.mxu0 0
        %481 = vmatpush1.bf16.msra.mxu0 %v460
        %482 = vmatprep.subr.bf16.mxu0 0
        %483 = vmatpush1.bf16.msra.mxu0 %v461
        %484 = vmatprep.subr.bf16.mxu0 0
        %485 = vmatpush1.bf16.msra.mxu0 %v462
        %486 = vmatprep.subr.bf16.mxu0 0
        %487 = vmatpush1.bf16.msra.mxu0 %v463
        %488 = vmatprep.subr.bf16.mxu0 0
        %489 = vmatpush1.bf16.msra.mxu0 %v464
        %490 = vmatprep.subr.bf16.mxu0 0
        %491 = vmatpush1.bf16.msra.mxu0 %v465
        %492 = vmatprep.subr.bf16.mxu0 0
        %493 = vmatpush1.bf16.msra.mxu0 %v466
        %494 = vmatprep.subr.bf16.mxu0 0
        %495 = vmatpush1.bf16.msra.mxu0 %v467
        %496 = vmatprep.subr.bf16.mxu0 0
        %497 = vmatpush1.bf16.msra.mxu0 %v468
        %498 = vmatprep.subr.bf16.mxu0 0
        %499 = vmatpush1.bf16.msra.mxu0 %v469
        %500 = vmatprep.subr.bf16.mxu0 0
        %501 = vmatpush1.bf16.msra.mxu0 %v470
        %502 = vmatprep.subr.bf16.mxu0 0
        %503 = vmatpush1.bf16.msra.mxu0 %v471
        %504 = vmatprep.subr.bf16.mxu0 0
        %505 = vmatpush1.bf16.msra.mxu0 %v472
        %506 = vmatprep.mubr.bf16.mxu0 %v262
        %507 = vmatmul.mubr.bf16.gmra.mrb[0].mxu0 %v261
        %v508 = vpop.f32.mrb[0].mxu0
        %v509 = vadd.f32 0.0, %v508
        %v510 = vpop.f32.mrb[0].mxu0
        %v511 = vpop.f32.mrb[0].mxu0
        %v512 = vpop.f32.mrb[0].mxu0
        %513 = vdwg.mxu0
        %v514 = vadd.f32 %v473, %v509
        %515 = vst [vmem:[%s148] sm:$0xff] %v514
        %s516 = sand.u32 %s66, 1
        %s517 = scalar_lea.sflag [#allocation4], %s516
        %s518 = sand.u32 %s66, 1
        %s519 = smul.addr %s518, 8
        %s520 = scalar_lea.vmem [#allocation5], %s519
        // Predicated region
        $region33: #{tpu_custom_call.1} parent=23 // pred_check
          %p521 = pneg %p76
        $region34: #{tpu_custom_call.1} parent=23 // pred_check_branch
          %523 = sbr.rel (%p521) target = $region36
        $region35: #{tpu_custom_call.1} parent=23 // pred_region
          %s525 = ssub.s32 128, 128
          %526 = vsyncadd %s517, %s525
          %s527 = smul.addr %s22, 128
          %s528 = scalar_lea.hbm %s1, %s527
          %s530 = sshll.u32 %s520, 4
          %s531 = int_to_ptr.vmem [resolvable:$true] %s530
          %533 = dma.vmem_to_hbm [thread:$0]  %s531, 128, %s528, %s517
        $region36: #{tpu_custom_call.1} parent=23 // pred_fallthru
          _
      $region24: #{tpu_custom_call.1} parent=5 // pred_fallthru
        _
      %p534 = scmp.le.s32.totalorder 2, %s13
      // Predicated region
      $region37: #{tpu_custom_call.1} parent=5 // pred_check
        %p535 = pneg %p534
      $region38: #{tpu_custom_call.1} parent=5 // pred_check_branch
        %537 = sbr.rel (%p535) target = $region40
      $region39: #{tpu_custom_call.1} parent=5 // pred_region
        %s538 = ssub.s32 %s13, 2
        // Predicated region
        $region41: #{tpu_custom_call.1} parent=39 // pred_check
          %p539 = pneg %p82
        $region42: #{tpu_custom_call.1} parent=39 // pred_check_branch
          %541 = sbr.rel (%p539) target = $region44
        $region43: #{tpu_custom_call.1} parent=39 // pred_region
          %s542 = sand.u32 %s67, 1
          %s543 = scalar_lea.sflag [#allocation4], %s542
          %s544 = sand.u32 %s67, 1
          %s545 = smul.addr %s544, 8
          %s546 = scalar_lea.vmem [#allocation5], %s545
          %547 = dma.done %s543, 128
        $region44: #{tpu_custom_call.1} parent=39 // pred_fallthru
          _
      $region40: #{tpu_custom_call.1} parent=5 // pred_fallthru
        _
    $region6: #{tpu_custom_call.1} parent=1 // loop_footer
      %s17 = sadd.s32 1, %s13
    $region7: #{tpu_custom_call.1} parent=1 // loop_footer_branch
      %12 = sbr.rel target = $region3
    $region8: #{tpu_custom_call.1} parent=1 // loop_exit
      _
    %548 = vsyncpa [#allocation3], 1
    %s549 = scalar_lea.sflag [#allocation3], 1
    %550 = vsyncpa %s549, 1
    %551 = vsyncpa [#allocation4], 1
    %s552 = scalar_lea.sflag [#allocation4], 1
    %553 = vsyncpa %s552, 1

</llo_original>
